<compile_context>
chip_gen: v6e
topology: v6e:2x2x1
jax: 0.10.0
libtpu: 0.0.40
codegen_flags: <defaults>
</compile_context>

<pallas_src>
import math

import jax
import jax.numpy as jnp
from jax import lax
from jax.experimental import pallas as pl
from jax.experimental.pallas import tpu as pltpu

# Full-f32 matmul precision everywhere: the pure-JAX reference einsums AND the
# in-kernel dots (traced after this point) agree to ~1e-6 instead of drifting apart
# through low-precision MXU passes.
jax.config.update("jax_default_matmul_precision", "float32")

# Raised scoped-VMEM budget: v5e/v6e default to 16/32 MiB of 128 MiB physical;
# v7x has only 64 MiB physical, so 48 MiB keeps headroom on every generation.
_VMEM_LIMIT_BYTES = 48 * 1024 * 1024


# ----------------------------------------------------------------------------
# Block-size helpers
# ----------------------------------------------------------------------------
def _round_up(x, m):
    return ((x + m - 1) // m) * m


def _block_and_pad(dim, target, align):
    """(block, padded_dim): block <= target, aligned when tiling is needed.
    Never falls back to a huge full-extent block for large awkward dims — it caps
    at `target` and zero-pads the array instead."""
    tgt = max(align, (target // align) * align)
    if dim <= tgt:
        return dim, dim                      # full-extent block (always legal)
    t = tgt
    while t >= align:                        # largest aligned divisor <= target
        if dim % t == 0:
            return t, dim
        t -= align
    return tgt, _round_up(dim, tgt)          # cap at target, pad with zeros


def _seq_block(dim, target):
    """Sequence-axis tile: largest multiple of 8 <= target that divides dim."""
    if dim <= target:
        return dim
    t = (min(target, dim) // 8) * 8
    while t >= 8:
        if dim % t == 0:
            return t
        t -= 8
    # TODO(synk): ragged sequence lengths would need in-kernel edge masking; fall
    # back to the full extent (correct, but VMEM-heavy for huge odd lengths).
    return dim


# ----------------------------------------------------------------------------
# Tiled linear kernel:  y = x @ W^T + b   (W pre-transposed once to (in_f, out_f))
# ----------------------------------------------------------------------------
def _make_linear_kernel(use_bf16):
    dot_dtype = jnp.bfloat16 if use_bf16 else jnp.float32

    def kernel(x_ref, wt_ref, b_ref, o_ref, acc_ref):
        k = pl.program_id(2)

        @pl.when(k == 0)
        def _init():
            acc_ref[...] = jnp.zeros_like(acc_ref)

        acc_ref[...] += jnp.dot(
            x_ref[...].astype(dot_dtype), wt_ref[...].astype(dot_dtype),
            preferred_element_type=jnp.float32)

        @pl.when(k == pl.num_programs(2) - 1)
        def _finalize():
            o_ref[...] = (acc_ref[...] + b_ref[...]).astype(o_ref.dtype)

    return kernel


def pallas_linear(x2d, weight, bias, *, tm=512, tn=512, tk=1024, use_bf16=False):
    """x2d: (M, in_f), weight: (out_f, in_f), bias: (out_f,) -> (M, out_f)."""
    M, in_f = x2d.shape
    out_f = weight.shape[0]

    # One-time transpose to (in_f, out_f): kernel runs a plain (M,K)x(K,N) MXU
    # contraction with no per-tile transpose of the weight tile.
    wt = weight.T
    b2 = bias.reshape(1, out_f)

    btm, mp = _block_and_pad(M, tm, 8)
    btn, np_ = _block_and_pad(out_f, tn, 128)
    btk, kp = _block_and_pad(in_f, tk, 128)

    if mp != M or kp != in_f:
        x2d = jnp.pad(x2d, ((0, mp - M), (0, kp - in_f)))
    if kp != in_f or np_ != out_f:
        wt = jnp.pad(wt, ((0, kp - in_f), (0, np_ - out_f)))
    if np_ != out_f:
        b2 = jnp.pad(b2, ((0, 0), (0, np_ - out_f)))

    grid = (mp // btm, np_ // btn, kp // btk)

    out = pl.pallas_call(
        _make_linear_kernel(use_bf16),
        out_shape=jax.ShapeDtypeStruct((mp, np_), x2d.dtype),
        grid=grid,
        in_specs=[
            pl.BlockSpec((btm, btk), lambda i, j, k: (i, k)),   # x tile
            pl.BlockSpec((btk, btn), lambda i, j, k: (k, j)),   # W^T tile
            pl.BlockSpec((1, btn), lambda i, j, k: (0, j)),     # bias tile
        ],
        out_specs=pl.BlockSpec((btm, btn), lambda i, j, k: (i, j)),
        scratch_shapes=[pltpu.VMEM((btm, btn), jnp.float32)],
        compiler_params=pltpu.CompilerParams(
            dimension_semantics=("parallel", "parallel", "arbitrary"),
            vmem_limit_bytes=_VMEM_LIMIT_BYTES),
    )(x2d, wt, b2)

    if mp != M or np_ != out_f:
        out = out[:M, :out_f]
    return out


# ----------------------------------------------------------------------------
# Flash-style attention kernel (one head per inner grid step, online softmax)
# ----------------------------------------------------------------------------
def _make_flash_kernel(scale, need_weights, n_kv, tkv, num_heads, use_bf16):
    dot_dtype = jnp.bfloat16 if use_bf16 else jnp.float32

    def kernel(q_ref, k_ref, v_ref, o_ref, *rest):
        if need_weights:
            w_ref, m_scr, l_scr, acc_scr, s_scr = rest
        else:
            m_scr, l_scr, acc_scr = rest

        h = pl.program_id(2)
        kj = pl.program_id(3)

        @pl.when(kj == 0)
        def _init():
            m_scr[...] = jnp.full_like(m_scr, -jnp.inf)
            l_scr[...] = jnp.zeros_like(l_scr)
            acc_scr[...] = jnp.zeros_like(acc_scr)

        q = q_ref[0].astype(jnp.float32) * scale            # (tq, d)
        k = k_ref[0]                                        # (tkv, d)
        v = v_ref[0]                                        # (tkv, d)

        # scores: contract head_dim directly (no K^T materialization / XLU transpose)
        s = lax.dot_general(
            q.astype(dot_dtype), k.astype(dot_dtype),
            dimension_numbers=(((1,), (1,)), ((), ())),
            preferred_element_type=jnp.float32)             # (tq, tkv)

        if need_weights:
            # Raw (already-scaled) score history, indexed by kv step: needed for
            # the exact head-averaged weights normalization at the last kv step.
            s_scr[kj] = s

        m_prev = m_scr[...]
        m_new = jnp.maximum(m_prev, jnp.max(s, axis=-1, keepdims=True))
        alpha = jnp.exp(m_prev - m_new)
        p = jnp.exp(s - m_new)
        l_scr[...] = alpha * l_scr[...] + jnp.sum(p, axis=-1, keepdims=True)
        acc_scr[...] = alpha * acc_scr[...] + jnp.dot(
            p.astype(dot_dtype), v.astype(dot_dtype),
            preferred_element_type=jnp.float32)
        m_scr[...] = m_new

        @pl.when(kj == n_kv - 1)
        def _finalize():
            # Exact reciprocal keeps f32 parity with the reference; approx=True is
            # the (essentially free) EUP fast path when tolerance allows.
            inv_l = pl.reciprocal(l_scr[...], approx=False)   # (tq, 1)
            o_ref[0] = (acc_scr[...] * inv_l).astype(o_ref.dtype)

            if need_weights:
                m_fin = m_scr[...]

                @pl.when(h == 0)
                def _w_init():
                    for j in range(n_kv):   # static unroll, static lane slices
                        w_ref[0, :, j * tkv:(j + 1) * tkv] = (
                            jnp.exp(s_scr[j] - m_fin) * inv_l)

                @pl.when(h > 0)
                def _w_acc():
                    for j in range(n_kv):
                        w_ref[0, :, j * tkv:(j + 1) * tkv] = (
                            w_ref[0, :, j * tkv:(j + 1) * tkv]
                            + jnp.exp(s_scr[j] - m_fin) * inv_l)

                @pl.when(h == num_heads - 1)
                def _w_avg():
                    w_ref[0] = w_ref[0] * (1.0 / num_heads)

    return kernel


def pallas_sdpa(q3, k3, v3, row_offsets, batch, num_heads, head_dim, *,
                need_weights=True, use_bf16=False, tq_target=256, tkv_target=512):
    """Head-major scaled dot-product attention.

    q3: (rows, Nt, d), k3/v3: (rows, Ns, d) where the (B*H) head-major rows for
    q/k/v start at row_offsets = (q_off, k_off, v_off).  For packed self-attention
    all three arguments are the SAME (3*B*H, L, d) buffer with offsets 0/BH/2BH,
    so no XLA slice copies are ever materialized.

    Returns (out (B*H, Nt, d), head-averaged weights (B, Nt, Ns) or None).
    Tile targets (tq=256, tkv=512) are sized against v7x's 64 MiB VMEM; they are
    conservative (and can be raised) on v5e/v6e's 128 MiB.
    """
    B, H, d = batch, num_heads, head_dim
    Nt, Ns = q3.shape[1], k3.shape[1]

    tq = _seq_block(Nt, tq_target)
    tkv = _seq_block(Ns, tkv_target)
    n_q, n_kv = Nt // tq, Ns // tkv
    grid = (B, n_q, H, n_kv)
    scale = 1.0 / math.sqrt(d)       # PyTorch scales q by 1/sqrt(head_dim)

    q_off, k_off, v_off = row_offsets
    in_specs = [
        pl.BlockSpec((1, tq, d), lambda b, qi, h, kj: (q_off + b * H + h, qi, 0)),
        pl.BlockSpec((1, tkv, d), lambda b, qi, h, kj: (k_off + b * H + h, kj, 0)),
        pl.BlockSpec((1, tkv, d), lambda b, qi, h, kj: (v_off + b * H + h, kj, 0)),
    ]
    o_shape = jax.ShapeDtypeStruct((B * H, Nt, d), q3.dtype)
    o_spec = pl.BlockSpec((1, tq, d), lambda b, qi, h, kj: (b * H + h, qi, 0))

    scratch = [
        pltpu.VMEM((tq, 1), jnp.float32),   # running row max
        pltpu.VMEM((tq, 1), jnp.float32),   # running softmax denominator
        pltpu.VMEM((tq, d), jnp.float32),   # f32 output accumulator
    ]
    kernel = _make_flash_kernel(scale, need_weights, n_kv, tkv, H, use_bf16)
    cparams = pltpu.CompilerParams(
        dimension_semantics=("parallel", "parallel", "arbitrary", "arbitrary"),
        vmem_limit_bytes=_VMEM_LIMIT_BYTES)

    if need_weights:
        w_shape = jax.ShapeDtypeStruct((B, Nt, Ns), jnp.float32)
        # resident across the h and kv axes -> in-kernel head-averaged accumulation,
        # written to HBM once per (b, q-tile).
        w_spec = pl.BlockSpec((1, tq, Ns), lambda b, qi, h, kj: (b, qi, 0))
        scratch.append(pltpu.VMEM((n_kv, tq, tkv), jnp.float32))   # score history
        out, w = pl.pallas_call(
            kernel,
            out_shape=(o_shape, w_shape),
            grid=grid,
            in_specs=in_specs,
            out_specs=(o_spec, w_spec),
            scratch_shapes=scratch,
            compiler_params=cparams,
        )(q3, k3, v3)
        return out, w

    out = pl.pallas_call(
        kernel,
        out_shape=o_shape,
        grid=grid,
        in_specs=in_specs,
        out_specs=o_spec,
        scratch_shapes=scratch,
        compiler_params=cparams,
    )(q3, k3, v3)
    return out, None


# ----------------------------------------------------------------------------
# MultiheadAttention forward (wrapper around the Pallas kernels)
# ----------------------------------------------------------------------------
def multihead_attention_forward(query, key, value, params, num_heads, *,
                                need_weights=True, use_bf16=False):
    """query/key/value: (L, B, E) (batch_first=False). Returns
    (attn_output (Nt, B, E), head-averaged attn weights (B, Nt, Ns) or None)."""
    tgt_len, bsz, E = query.shape
    head_dim = E // num_heads
    assert head_dim * num_heads == E
    BH = bsz * num_heads

    in_w = params["in_proj_weight"]      # (3E, E)
    in_b = params["in_proj_bias"]        # (3E,)
    out_w = params["out_proj_weight"]    # (E, E)
    out_b = params["out_proj_bias"]      # (E,)

    q_in = jnp.transpose(query, (1, 0, 2))                  # (B, Nt, E)

    # Self-attention fast path keyed on object identity, like the reference
    # (`q is k`, `k is v`); equal-but-distinct arrays take the general path.
    if (key is query) and (value is query):
        # Fused packed QKV projection (x read from HBM once, 3E-wide MXU N dim),
        # then ONE head-major reshuffle; the packed (3*B*H, Nt, d) buffer is handed
        # to the attention kernel three times via row offsets -> no q/k/v slices.
        qkv = pallas_linear(q_in.reshape(bsz * tgt_len, E), in_w, in_b,
                            use_bf16=use_bf16)              # (B*Nt, 3E)
        qkv_h = (qkv.reshape(bsz, tgt_len, 3, num_heads, head_dim)
                 .transpose(2, 0, 3, 1, 4)
                 .reshape(3 * BH, tgt_len, head_dim))
        q3 = k3 = v3 = qkv_h
        offsets = (0, BH, 2 * BH)
    else:
        # General (cross-attention) path: separate projections, same semantics.
        k_in = jnp.transpose(key, (1, 0, 2))
        v_in = jnp.transpose(value, (1, 0, 2))
        w_q, w_k, w_v = in_w[:E], in_w[E:2 * E], in_w[2 * E:]
        b_q, b_k, b_v = in_b[:E], in_b[E:2 * E], in_b[2 * E:]

        def _proj_heads(x_in, w, b):
            L = x_in.shape[1]
            y = pallas_linear(x_in.reshape(bsz * L, x_in.shape[-1]), w, b,
                              use_bf16=use_bf16)
            return (y.reshape(bsz, L, num_heads, head_dim)
                    .transpose(0, 2, 1, 3).reshape(BH, L, head_dim))

        q3 = _proj_heads(q_in, w_q, b_q)
        k3 = _proj_heads(k_in, w_k, b_k)
        v3 = _proj_heads(v_in, w_v, b_v)
        offsets = (0, 0, 0)

    attn_h, attn_w = pallas_sdpa(q3, k3, v3, offsets, bsz, num_heads, head_dim,
                                 need_weights=need_weights, use_bf16=use_bf16)

    # (B*H, Nt, d) -> (B*Nt, E), out-projection, back to (Nt, B, E).
    attn_bt = (attn_h.reshape(bsz, num_heads, tgt_len, head_dim)
               .transpose(0, 2, 1, 3).reshape(bsz * tgt_len, E))
    out = pallas_linear(attn_bt, out_w, out_b, use_bf16=use_bf16)
    out = out.reshape(bsz, tgt_len, E).transpose(1, 0, 2)
    return out, attn_w


# ----------------------------------------------------------------------------
# Pure-JAX reference for a correctness check
# ----------------------------------------------------------------------------
def reference_forward(query, key, value, params, num_heads):
    tgt_len, bsz, E = query.shape
    src_len = key.shape[0]
    head_dim = E // num_heads
    in_w, in_b = params["in_proj_weight"], params["in_proj_bias"]
    out_w, out_b = params["out_proj_weight"], params["out_proj_bias"]

    qkv = query @ in_w.T + in_b
    q, k, v = jnp.split(qkv, 3, axis=-1)
    q = q.reshape(tgt_len, bsz * num_heads, head_dim).transpose(1, 0, 2)
    k = k.reshape(src_len, bsz * num_heads, head_dim).transpose(1, 0, 2)
    v = v.reshape(src_len, bsz * num_heads, head_dim).transpose(1, 0, 2)

    s = jnp.einsum("bqd,bkd->bqk", q / math.sqrt(head_dim), k)
    attn = jax.nn.softmax(s, axis=-1)
    out = jnp.einsum("bqk,bkd->bqd", attn, v)
    out = out.transpose(1, 0, 2).reshape(tgt_len, bsz, E)
    out = out @ out_w.T + out_b
    attn = attn.reshape(bsz, num_heads, tgt_len, src_len).sum(axis=1) / num_heads
    return out, attn


# ----------------------------------------------------------------------------
# Deterministic parameter initialization (mirrors __init__/_reset_parameters shapes)
# ----------------------------------------------------------------------------
def init_params(key, embed_dim):
    k1, k2 = jax.random.split(key, 2)
    # xavier_uniform_ for in_proj_weight (3E, E)
    bound_in = math.sqrt(6.0 / (embed_dim + 3 * embed_dim))
    in_proj_weight = jax.random.uniform(
        k1, (3 * embed_dim, embed_dim), jnp.float32, -bound_in, bound_in)
    in_proj_bias = jnp.zeros((3 * embed_dim,), jnp.float32)     # constant_(0.0)
    # out_proj: nn.Linear-style uniform init; bias zeroed by _reset_parameters
    bound_out = 1.0 / math.sqrt(embed_dim)
    out_proj_weight = jax.random.uniform(
        k2, (embed_dim, embed_dim), jnp.float32, -bound_out, bound_out)
    out_proj_bias = jnp.zeros((embed_dim,), jnp.float32)
    return {
        "in_proj_weight": in_proj_weight,
        "in_proj_bias": in_proj_bias,
        "out_proj_weight": out_proj_weight,
        "out_proj_bias": out_proj_bias,
    }


if __name__ == "__main__":
    # small shapes: seq=8, batch=2, embed_dim=32, num_heads=4 (head_dim=8)
    seq_len, bsz, embed_dim, num_heads = 8, 2, 32, 4

    root = jax.random.PRNGKey(0)
    kp, kq = jax.random.split(root, 2)
    params = init_params(kp, embed_dim)

    # layout (seq, batch, embed) as in batch_first=False
    x = jax.random.normal(kq, (seq_len, bsz, embed_dim), jnp.float32)

    ref_out, ref_w = reference_forward(x, x, x, params, num_heads)

    # 1) self-attention (packed QKV fast path), need_weights=True (module default)
    attn_out, attn_w = multihead_attention_forward(
        x, x, x, params, num_heads, need_weights=True)
    attn_out = jax.block_until_ready(attn_out)
    attn_w = jax.block_until_ready(attn_w)
    assert attn_out.shape == (seq_len, bsz, embed_dim)
    assert attn_w.shape == (bsz, seq_len, seq_len)
    assert jnp.allclose(attn_out, ref_out, atol=1e-4, rtol=1e-4)
    assert jnp.allclose(attn_w, ref_w, atol=1e-4, rtol=1e-4)

    # 2) flash path without the O(L^2) weights output
    out_nw, w_nw = multihead_attention_forward(
        x, x, x, params, num_heads, need_weights=False)
    out_nw = jax.block_until_ready(out_nw)
    assert w_nw is None
    assert jnp.allclose(out_nw, ref_out, atol=1e-4, rtol=1e-4)

    # 3) general (non-packed) projection path: same values, distinct array objects
    x2 = x + 0.0
    out_x, w_x = multihead_attention_forward(
        x, x2, x2, params, num_heads, need_weights=True)
    out_x = jax.block_until_ready(out_x)
    assert jnp.allclose(out_x, ref_out, atol=1e-4, rtol=1e-4)
    assert jnp.allclose(w_x, ref_w, atol=1e-4, rtol=1e-4)

    print("KERNEL_OK")
</pallas_src>

<mosaic_0001>
module attributes {stable_mosaic.version = 11 : i64} {
  func.func @kernel(%arg0: i32, %arg1: i32, %arg2: i32, %arg3: memref<16x32xf32, #tpu.memory_space<vmem>>, %arg4: memref<32x96xf32, #tpu.memory_space<vmem>>, %arg5: memref<1x96xf32, #tpu.memory_space<vmem>>, %arg6: memref<16x96xf32, #tpu.memory_space<vmem>>, %arg7: memref<16x96xf32, #tpu.memory_space<vmem>>) attributes {dimension_semantics = [#tpu.dimension_semantics<parallel>, #tpu.dimension_semantics<parallel>, #tpu.dimension_semantics<arbitrary>], iteration_bounds = array<i64: 1, 1, 1>, scalar_prefetch = 0 : i64, scratch_operands = 1 : i64, tpu.core_type = #tpu.core_type<tc>, window_params = [{transform_indices = @transform_0, window_bounds = array<i64: 16, 32>}, {transform_indices = @transform_1, window_bounds = array<i64: 32, 96>}, {transform_indices = @transform_2, window_bounds = array<i64: 1, 96>}, {transform_indices = @transform_3, window_bounds = array<i64: 16, 96>}]} {
    %c0_i32 = arith.constant 0 : i32
    %0 = arith.cmpi eq, %arg2, %c0_i32 : i32
    %1 = arith.extui %0 : i1 to i32
    %c0_i32_0 = arith.constant 0 : i32
    %2 = arith.cmpi ne, %1, %c0_i32_0 : i32
    scf.if %2 {
      %cst_10 = arith.constant 0.000000e+00 : f32
      %12 = vector.broadcast %cst_10 : f32 to vector<16x96xf32>
      %c0_11 = arith.constant 0 : index
      %c0_12 = arith.constant 0 : index
      %13 = vector.load %arg7[%c0_11, %c0_12] : memref<16x96xf32, #tpu.memory_space<vmem>>, vector<16x96xf32>
      tpu.vector_store %arg7[%c0_11, %c0_12], %12 {strides = array<i32>} : memref<16x96xf32, #tpu.memory_space<vmem>>, vector<16x96xf32>,
    } else {
    }
    %c0 = arith.constant 0 : index
    %c0_1 = arith.constant 0 : index
    %3 = vector.load %arg7[%c0, %c0_1] : memref<16x96xf32, #tpu.memory_space<vmem>>, vector<16x96xf32>
    %c0_2 = arith.constant 0 : index
    %c0_3 = arith.constant 0 : index
    %4 = vector.load %arg3[%c0_2, %c0_3] : memref<16x32xf32, #tpu.memory_space<vmem>>, vector<16x32xf32>
    %c0_4 = arith.constant 0 : index
    %c0_5 = arith.constant 0 : index
    %5 = vector.load %arg4[%c0_4, %c0_5] : memref<32x96xf32, #tpu.memory_space<vmem>>, vector<32x96xf32>
    %cst = arith.constant dense<0.000000e+00> : vector<16x96xf32>
    %6 = tpu.matmul %4, %5, %cst {dimension_numbers = #tpu.dot_dimension_numbers<[1], [0], [0], [1], [0, 0, 1, 1], [], []>, precision = #tpu.contract_precision<fp32>} : vector<16x32xf32>, vector<32x96xf32>, vector<16x96xf32> -> vector<16x96xf32>
    %7 = arith.addf %3, %6 : vector<16x96xf32>
    %c0_6 = arith.constant 0 : index
    %c0_7 = arith.constant 0 : index
    %8 = vector.load %arg7[%c0_6, %c0_7] : memref<16x96xf32, #tpu.memory_space<vmem>>, vector<16x96xf32>
    tpu.vector_store %arg7[%c0_6, %c0_7], %7 {strides = array<i32>} : memref<16x96xf32, #tpu.memory_space<vmem>>, vector<16x96xf32>,
    %c0_i32_8 = arith.constant 0 : i32
    %9 = arith.cmpi eq, %arg2, %c0_i32_8 : i32
    %10 = arith.extui %9 : i1 to i32
    %c0_i32_9 = arith.constant 0 : i32
    %11 = arith.cmpi ne, %10, %c0_i32_9 : i32
    scf.if %11 {
      %c0_10 = arith.constant 0 : index
      %c0_11 = arith.constant 0 : index
      %12 = vector.load %arg7[%c0_10, %c0_11] : memref<16x96xf32, #tpu.memory_space<vmem>>, vector<16x96xf32>
      %c0_12 = arith.constant 0 : index
      %c0_13 = arith.constant 0 : index
      %13 = vector.load %arg5[%c0_12, %c0_13] : memref<1x96xf32, #tpu.memory_space<vmem>>, vector<1x96xf32>
      %14 = vector.broadcast %13 : vector<1x96xf32> to vector<16x96xf32>
      %15 = arith.addf %12, %14 : vector<16x96xf32>
      %c0_14 = arith.constant 0 : index
      %c0_15 = arith.constant 0 : index
      %16 = vector.load %arg6[%c0_14, %c0_15] : memref<16x96xf32, #tpu.memory_space<vmem>>, vector<16x96xf32>
      tpu.vector_store %arg6[%c0_14, %c0_15], %15 {strides = array<i32>} : memref<16x96xf32, #tpu.memory_space<vmem>>, vector<16x96xf32>,
    } else {
    }
    return
  }
  func.func @transform_0(%arg0: i32, %arg1: i32, %arg2: i32) -> (i32, i32) {
    %c0_i32 = arith.constant 0 : i32
    return %arg0, %arg2 : i32, i32
  }
  func.func @transform_1(%arg0: i32, %arg1: i32, %arg2: i32) -> (i32, i32) {
    %c0_i32 = arith.constant 0 : i32
    return %arg2, %arg1 : i32, i32
  }
  func.func @transform_2(%arg0: i32, %arg1: i32, %arg2: i32) -> (i32, i32) {
    %c0_i32 = arith.constant 0 : i32
    %c0_i32_0 = arith.constant 0 : i32
    return %c0_i32, %arg1 : i32, i32
  }
  func.func @transform_3(%arg0: i32, %arg1: i32, %arg2: i32) -> (i32, i32) {
    %c0_i32 = arith.constant 0 : i32
    return %arg0, %arg1 : i32, i32
  }
}

</mosaic_0001>

<llo_original>
// kernel: tpu_custom_call.1
$region0: #{tpu_custom_call.1}
  #allocation0 [shape = 'u32[]', space=smem, size = 0x4, offset = 0x4, fixed_abs, tag = 'smem constant byte address 0x4 - core index']
  #allocation1 [shape = 'u32[144,128]{1,0:T(1,128)}', space=vmem, size = 0x12000, scoped, tag = 'internal scratch']
  #allocation2 [shape = 'f32[16,96]{1,0:T(8,128)}', space=vmem, size = 0x2000, scoped, tag = 'scratch operand']
  %s0 = inlined_call_operand.hbm [shape: f32[16,32], index: 0, kind: input, shape index: {}]
  %s1 = inlined_call_operand.hbm [shape: f32[32,96], index: 1, kind: input, shape index: {}]
  %s2 = inlined_call_operand.vmem [shape: f32[1,96], index: 2, kind: input, shape index: {}]
  %s3 = inlined_call_operand.hbm [shape: f32[16,96], index: 3, kind: output, shape index: {}]
  %s4 = sld [smem:[#allocation0]]
  $region38: #{tpu_custom_call.1} parent=0
    _
  %s6 = ssub.s32 1, %s4
  %s7 = scalar_select 0, %s6, %s4
  $region1: #{tpu_custom_call.1} parent=0
    #allocation3 [shape = 'u8[8192]{0}', space=vmem, size = 0x2000, scoped, tag = 'input window, operand 0, single buffered']
    #allocation4 [shape = 's32[1]{0}', space=sflag, size = 0x4, scoped, tag = 'scoped memory for tpu_custom_call.1']
    #allocation5 [shape = 's32[1]{0}', space=sflag, size = 0x4, scoped, tag = 'scoped memory for tpu_custom_call.1']
    #allocation6 [shape = 'u8[16384]{0}', space=vmem, size = 0x4000, scoped, tag = 'input window, operand 1, single buffered']
    #allocation7 [shape = 's32[1]{0}', space=sflag, size = 0x4, scoped, tag = 'scoped memory for tpu_custom_call.1']
    #allocation8 [shape = 'u8[8192]{0}', space=vmem, size = 0x2000, scoped, tag = 'output window, operand 0, single buffered']
    %8 = vsyncpa [#allocation4], 0
    %9 = vsyncpa [#allocation7], 0
    %10 = vsyncpa [#allocation5], 0
    // Predicated region
    $region2: #{tpu_custom_call.1} parent=1 // pred_check
      _
    $region3: #{tpu_custom_call.1} parent=1 // pred_check_branch
      %12 = sbr.rel (0) target = $region5
    $region4: #{tpu_custom_call.1} parent=1 // pred_region
      %s14 = ssub.s32 256, 256
      %15 = vsyncadd [#allocation4], %s14
      %s16 = sshll.u32 [#allocation3], 4
      %s17 = int_to_ptr.vmem [resolvable:$true] %s16
      %22 = dma.hbm_to_vmem [thread:$0]  %s0, 256, %s17, [#allocation4], 128, 128, 8
    $region5: #{tpu_custom_call.1} parent=1 // pred_fallthru
      _
    // Predicated region
    $region6: #{tpu_custom_call.1} parent=1 // pred_check
      _
    $region7: #{tpu_custom_call.1} parent=1 // pred_check_branch
      %24 = sbr.rel (0) target = $region9
    $region8: #{tpu_custom_call.1} parent=1 // pred_region
      %s26 = ssub.s32 512, 512
      %27 = vsyncadd [#allocation7], %s26
      %s28 = sshll.u32 [#allocation6], 4
      %s29 = int_to_ptr.vmem [resolvable:$true] %s28
      %34 = dma.hbm_to_vmem [thread:$0]  %s1, 512, %s29, [#allocation7], 128, 128, 8
    $region9: #{tpu_custom_call.1} parent=1 // pred_fallthru
      _
    // Predicated region
    $region10: #{tpu_custom_call.1} parent=1 // pred_check
      _
    $region11: #{tpu_custom_call.1} parent=1 // pred_check_branch
      %36 = sbr.rel (0) target = $region13
    $region12: #{tpu_custom_call.1} parent=1 // pred_region
      _
    $region13: #{tpu_custom_call.1} parent=1 // pred_fallthru
      _
    // Predicated region
    $region14: #{tpu_custom_call.1} parent=1 // pred_check
      _
    $region15: #{tpu_custom_call.1} parent=1 // pred_check_branch
      %38 = sbr.rel (0) target = $region17
    $region16: #{tpu_custom_call.1} parent=1 // pred_region
      %39 = dma.done [#allocation4], 256
    $region17: #{tpu_custom_call.1} parent=1 // pred_fallthru
      _
    // Predicated region
    $region18: #{tpu_custom_call.1} parent=1 // pred_check
      _
    $region19: #{tpu_custom_call.1} parent=1 // pred_check_branch
      %41 = sbr.rel (0) target = $region21
    $region20: #{tpu_custom_call.1} parent=1 // pred_region
      %42 = dma.done [#allocation7], 512
    $region21: #{tpu_custom_call.1} parent=1 // pred_fallthru
      _
    %p43 = scmp.eq.s32.totalorder 0, 0
    // Predicated region
    $region22: #{tpu_custom_call.1} parent=1 // pred_check
      %p44 = pneg %p43
    $region23: #{tpu_custom_call.1} parent=1 // pred_check_branch
      %46 = sbr.rel (%p44) target = $region25
    $region24: #{tpu_custom_call.1} parent=1 // pred_region
      %vm47 = vcmask 785408
      %48 = vst.msk [vmem:[#allocation2] sm:$0xff] %vm47, 0.0
      %49 = vst.msk [vmem:[#allocation2 + $0x8] sm:$0xff] %vm47, 0.0
    $region25: #{tpu_custom_call.1} parent=1 // pred_fallthru
      _
    %v50 = vld [vmem:[#allocation2] sm:$0xff]
    %v51 = vld [vmem:[#allocation2 + $0x8] sm:$0xff]
    %v52 = vld [vmem:[#allocation3] sm:$0xff]
    %v53 = vld [vmem:[#allocation3 + $0x8] sm:$0xff]
    %v54 = vld [vmem:[#allocation6] sm:$0xff]
    %v55 = vld [vmem:[#allocation6 + $0x8] sm:$0xff]
    %v56 = vld [vmem:[#allocation6 + $0x10] sm:$0xff]
    %v57 = vld [vmem:[#allocation6 + $0x18] sm:$0xff]
    %vm58 = vcmask 261120
    %v60 = vsel %vm58, %v52, 0
    %v63 = vsel %vm58, %v53, 0
    %65 = vmatprep.subr.mxu0 0.0
    %66 = vmatpush1.msra.mxu0 0.0
    %67 = vmatprep.subr.mxu0 0.0
    %68 = vmatpush1.msra.mxu0 0.0
    %69 = vmatprep.subr.mxu0 0.0
    %70 = vmatpush1.msra.mxu0 0.0
    %71 = vmatprep.subr.mxu0 0.0
    %72 = vmatpush1.msra.mxu0 0.0
    %73 = vmatprep.subr.mxu0 0.0
    %74 = vmatpush1.msra.mxu0 0.0
    %75 = vmatprep.subr.mxu0 0.0
    %76 = vmatpush1.msra.mxu0 0.0
    %77 = vmatprep.subr.mxu0 0.0
    %78 = vmatpush1.msra.mxu0 0.0
    %79 = vmatprep.subr.mxu0 0.0
    %80 = vmatpush1.msra.mxu0 0.0
    %81 = vmatprep.subr.mxu0 0.0
    %82 = vmatpush1.msra.mxu0 0.0
    %83 = vmatprep.subr.mxu0 0.0
    %84 = vmatpush1.msra.mxu0 0.0
    %85 = vmatprep.subr.mxu0 0.0
    %86 = vmatpush1.msra.mxu0 0.0
    %87 = vmatprep.subr.mxu0 0.0
    %88 = vmatpush1.msra.mxu0 0.0
    %89 = vmatprep.subr.mxu0 0.0
    %v90 = vand.u32 %v57, 4294901760
    %91 = vmatpush1.msra.mxu0 %v90
    %92 = vmatprep.subr.mxu0 0.0
    %v93 = vand.u32 %v56, 4294901760
    %94 = vmatpush1.msra.mxu0 %v93
    %95 = vmatprep.subr.mxu0 0.0
    %v96 = vand.u32 %v55, 4294901760
    %97 = vmatpush1.msra.mxu0 %v96
    %98 = vmatprep.subr.mxu0 0.0
    %v99 = vand.u32 %v54, 4294901760
    %100 = vmatpush1.msra.mxu0 %v99
    %101 = vmatprep.subr.mxu0 0.0
    %102 = vmatpush2.msra.mxu0 0.0
    %103 = vmatprep.subr.mxu0 0.0
    %104 = vmatpush2.msra.mxu0 0.0
    %105 = vmatprep.subr.mxu0 0.0
    %106 = vmatpush2.msra.mxu0 0.0
    %107 = vmatprep.subr.mxu0 0.0
    %108 = vmatpush2.msra.mxu0 0.0
    %109 = vmatprep.subr.mxu0 0.0
    %110 = vmatpush2.msra.mxu0 0.0
    %111 = vmatprep.subr.mxu0 0.0
    %112 = vmatpush2.msra.mxu0 0.0
    %113 = vmatprep.subr.mxu0 0.0
    %114 = vmatpush2.msra.mxu0 0.0
    %115 = vmatprep.subr.mxu0 0.0
    %116 = vmatpush2.msra.mxu0 0.0
    %117 = vmatprep.subr.mxu0 0.0
    %118 = vmatpush2.msra.mxu0 0.0
    %119 = vmatprep.subr.mxu0 0.0
    %120 = vmatpush2.msra.mxu0 0.0
    %121 = vmatprep.subr.mxu0 0.0
    %122 = vmatpush2.msra.mxu0 0.0
    %123 = vmatprep.subr.mxu0 0.0
    %124 = vmatpush2.msra.mxu0 0.0
    %125 = vmatprep.subr.mxu0 0.0
    %126 = vmatpush2.msra.mxu0 0.0
    %127 = vmatprep.subr.mxu0 0.0
    %128 = vmatpush2.msra.mxu0 0.0
    %129 = vmatprep.subr.mxu0 0.0
    %130 = vmatpush2.msra.mxu0 0.0
    %131 = vmatprep.subr.mxu0 0.0
    %132 = vmatpush2.msra.mxu0 0.0
    %133 = vmatprep.mubr.f32.mxu0 0.0
    %v134 = vand.u32 %v60, 4294901760
    %v135 = vsub.f32 %v60, %v134
    %v136 = vand.u32 %v135, 4294901760
    %v137 = vsub.f32 %v135, %v136
    %v138 = vand.u32 %v137, 4294901760
    %139 = vmatmul.mubr.f32.gmra.mxu0 %v138
    %v140 = vpop.f32.mrf.mxu0
    %v141 = vadd.f32 0.0, %v140
    %v142 = vpop.f32.mrf.mxu0
    %143 = vmatprep.mubr.f32.mxu0 0.0
    %v144 = vand.u32 %v63, 4294901760
    %v145 = vsub.f32 %v63, %v144
    %v146 = vand.u32 %v145, 4294901760
    %v147 = vsub.f32 %v145, %v146
    %v148 = vand.u32 %v147, 4294901760
    %149 = vmatmul.mubr.f32.gmra.mxu0 %v148
    %v150 = vpop.f32.mrf.mxu0
    %v151 = vadd.f32 0.0, %v150
    %v152 = vpop.f32.mrf.mxu0
    %153 = vdwg.mxu0
    %154 = vmatprep.subr.mxu0 0.0
    %155 = vmatpush1.msra.mxu0 0.0
    %156 = vmatprep.subr.mxu0 0.0
    %157 = vmatpush1.msra.mxu0 0.0
    %158 = vmatprep.subr.mxu0 0.0
    %159 = vmatpush1.msra.mxu0 0.0
    %160 = vmatprep.subr.mxu0 0.0
    %161 = vmatpush1.msra.mxu0 0.0
    %162 = vmatprep.subr.mxu0 0.0
    %163 = vmatpush1.msra.mxu0 0.0
    %164 = vmatprep.subr.mxu0 0.0
    %165 = vmatpush1.msra.mxu0 0.0
    %166 = vmatprep.subr.mxu0 0.0
    %167 = vmatpush1.msra.mxu0 0.0
    %168 = vmatprep.subr.mxu0 0.0
    %169 = vmatpush1.msra.mxu0 0.0
    %170 = vmatprep.subr.mxu0 0.0
    %171 = vmatpush1.msra.mxu0 0.0
    %172 = vmatprep.subr.mxu0 0.0
    %173 = vmatpush1.msra.mxu0 0.0
    %174 = vmatprep.subr.mxu0 0.0
    %175 = vmatpush1.msra.mxu0 0.0
    %176 = vmatprep.subr.mxu0 0.0
    %177 = vmatpush1.msra.mxu0 0.0
    %178 = vmatprep.subr.mxu0 0.0
    %v179 = vand.u32 %v57, 4294901760
    %v180 = vsub.f32 %v57, %v179
    %v181 = vand.u32 %v180, 4294901760
    %v182 = vsub.f32 %v180, %v181
    %v183 = vand.u32 %v182, 4294901760
    %184 = vmatpush1.msra.mxu0 %v183
    %185 = vmatprep.subr.mxu0 0.0
    %v186 = vand.u32 %v56, 4294901760
    %v187 = vsub.f32 %v56, %v186
    %v188 = vand.u32 %v187, 4294901760
    %v189 = vsub.f32 %v187, %v188
    %v190 = vand.u32 %v189, 4294901760
    %191 = vmatpush1.msra.mxu0 %v190
    %192 = vmatprep.subr.mxu0 0.0
    %v193 = vand.u32 %v55, 4294901760
    %v194 = vsub.f32 %v55, %v193
    %v195 = vand.u32 %v194, 4294901760
    %v196 = vsub.f32 %v194, %v195
    %v197 = vand.u32 %v196, 4294901760
    %198 = vmatpush1.msra.mxu0 %v197
    %199 = vmatprep.subr.mxu0 0.0
    %v200 = vand.u32 %v54, 4294901760
    %v201 = vsub.f32 %v54, %v200
    %v202 = vand.u32 %v201, 4294901760
    %v203 = vsub.f32 %v201, %v202
    %v204 = vand.u32 %v203, 4294901760
    %205 = vmatpush1.msra.mxu0 %v204
    %206 = vmatprep.subr.mxu0 0.0
    %207 = vmatpush2.msra.mxu0 0.0
    %208 = vmatprep.subr.mxu0 0.0
    %209 = vmatpush2.msra.mxu0 0.0
    %210 = vmatprep.subr.mxu0 0.0
    %211 = vmatpush2.msra.mxu0 0.0
    %212 = vmatprep.subr.mxu0 0.0
    %213 = vmatpush2.msra.mxu0 0.0
    %214 = vmatprep.subr.mxu0 0.0
    %215 = vmatpush2.msra.mxu0 0.0
    %216 = vmatprep.subr.mxu0 0.0
    %217 = vmatpush2.msra.mxu0 0.0
    %218 = vmatprep.subr.mxu0 0.0
    %219 = vmatpush2.msra.mxu0 0.0
    %220 = vmatprep.subr.mxu0 0.0
    %221 = vmatpush2.msra.mxu0 0.0
    %222 = vmatprep.subr.mxu0 0.0
    %223 = vmatpush2.msra.mxu0 0.0
    %224 = vmatprep.subr.mxu0 0.0
    %225 = vmatpush2.msra.mxu0 0.0
    %226 = vmatprep.subr.mxu0 0.0
    %227 = vmatpush2.msra.mxu0 0.0
    %228 = vmatprep.subr.mxu0 0.0
    %229 = vmatpush2.msra.mxu0 0.0
    %230 = vmatprep.subr.mxu0 0.0
    %231 = vmatpush2.msra.mxu0 0.0
    %232 = vmatprep.subr.mxu0 0.0
    %233 = vmatpush2.msra.mxu0 0.0
    %234 = vmatprep.subr.mxu0 0.0
    %235 = vmatpush2.msra.mxu0 0.0
    %236 = vmatprep.subr.mxu0 0.0
    %237 = vmatpush2.msra.mxu0 0.0
    %238 = vmatprep.mubr.f32.mxu0 0.0
    %v239 = vand.u32 %v60, 4294901760
    %240 = vmatmul.mubr.f32.gmra.mxu0 %v239
    %v241 = vpop.f32.mrf.mxu0
    %v242 = vadd.f32 %v141, %v241
    %v243 = vpop.f32.mrf.mxu0
    %244 = vmatprep.mubr.f32.mxu0 0.0
    %v245 = vand.u32 %v63, 4294901760
    %246 = vmatmul.mubr.f32.gmra.mxu0 %v245
    %v247 = vpop.f32.mrf.mxu0
    %v248 = vadd.f32 %v151, %v247
    %v249 = vpop.f32.mrf.mxu0
    %250 = vdwg.mxu0
    %251 = vmatprep.subr.mxu0 0.0
    %252 = vmatpush1.msra.mxu0 0.0
    %253 = vmatprep.subr.mxu0 0.0
    %254 = vmatpush1.msra.mxu0 0.0
    %255 = vmatprep.subr.mxu0 0.0
    %256 = vmatpush1.msra.mxu0 0.0
    %257 = vmatprep.subr.mxu0 0.0
    %258 = vmatpush1.msra.mxu0 0.0
    %259 = vmatprep.subr.mxu0 0.0
    %260 = vmatpush1.msra.mxu0 0.0
    %261 = vmatprep.subr.mxu0 0.0
    %262 = vmatpush1.msra.mxu0 0.0
    %263 = vmatprep.subr.mxu0 0.0
    %264 = vmatpush1.msra.mxu0 0.0
    %265 = vmatprep.subr.mxu0 0.0
    %266 = vmatpush1.msra.mxu0 0.0
    %267 = vmatprep.subr.mxu0 0.0
    %268 = vmatpush1.msra.mxu0 0.0
    %269 = vmatprep.subr.mxu0 0.0
    %270 = vmatpush1.msra.mxu0 0.0
    %271 = vmatprep.subr.mxu0 0.0
    %272 = vmatpush1.msra.mxu0 0.0
    %273 = vmatprep.subr.mxu0 0.0
    %274 = vmatpush1.msra.mxu0 0.0
    %275 = vmatprep.subr.mxu0 0.0
    %v276 = vand.u32 %v57, 4294901760
    %v277 = vsub.f32 %v57, %v276
    %278 = vmatpush1.msra.mxu0 %v277
    %279 = vmatprep.subr.mxu0 0.0
    %v280 = vand.u32 %v56, 4294901760
    %v281 = vsub.f32 %v56, %v280
    %282 = vmatpush1.msra.mxu0 %v281
    %283 = vmatprep.subr.mxu0 0.0
    %v284 = vand.u32 %v55, 4294901760
    %v285 = vsub.f32 %v55, %v284
    %286 = vmatpush1.msra.mxu0 %v285
    %287 = vmatprep.subr.mxu0 0.0
    %v288 = vand.u32 %v54, 4294901760
    %v289 = vsub.f32 %v54, %v288
    %290 = vmatpush1.msra.mxu0 %v289
    %291 = vmatprep.subr.mxu0 0.0
    %292 = vmatpush2.msra.mxu0 0.0
    %293 = vmatprep.subr.mxu0 0.0
    %294 = vmatpush2.msra.mxu0 0.0
    %295 = vmatprep.subr.mxu0 0.0
    %296 = vmatpush2.msra.mxu0 0.0
    %297 = vmatprep.subr.mxu0 0.0
    %298 = vmatpush2.msra.mxu0 0.0
    %299 = vmatprep.subr.mxu0 0.0
    %300 = vmatpush2.msra.mxu0 0.0
    %301 = vmatprep.subr.mxu0 0.0
    %302 = vmatpush2.msra.mxu0 0.0
    %303 = vmatprep.subr.mxu0 0.0
    %304 = vmatpush2.msra.mxu0 0.0
    %305 = vmatprep.subr.mxu0 0.0
    %306 = vmatpush2.msra.mxu0 0.0
    %307 = vmatprep.subr.mxu0 0.0
    %308 = vmatpush2.msra.mxu0 0.0
    %309 = vmatprep.subr.mxu0 0.0
    %310 = vmatpush2.msra.mxu0 0.0
    %311 = vmatprep.subr.mxu0 0.0
    %312 = vmatpush2.msra.mxu0 0.0
    %313 = vmatprep.subr.mxu0 0.0
    %314 = vmatpush2.msra.mxu0 0.0
    %315 = vmatprep.subr.mxu0 0.0
    %316 = vmatpush2.msra.mxu0 0.0
    %317 = vmatprep.subr.mxu0 0.0
    %318 = vmatpush2.msra.mxu0 0.0
    %319 = vmatprep.subr.mxu0 0.0
    %320 = vmatpush2.msra.mxu0 0.0
    %321 = vmatprep.subr.mxu0 0.0
    %322 = vmatpush2.msra.mxu0 0.0
    %323 = vmatprep.mubr.f32.mxu0 0.0
    %v324 = vand.u32 %v60, 4294901760
    %v325 = vsub.f32 %v60, %v324
    %326 = vmatmul.mubr.f32.gmra.mxu0 %v325
    %v327 = vpop.f32.mrf.mxu0
    %v328 = vadd.f32 %v242, %v327
    %v329 = vpop.f32.mrf.mxu0
    %330 = vmatprep.mubr.f32.mxu0 0.0
    %v331 = vand.u32 %v63, 4294901760
    %v332 = vsub.f32 %v63, %v331
    %333 = vmatmul.mubr.f32.gmra.mxu0 %v332
    %v334 = vpop.f32.mrf.mxu0
    %v335 = vadd.f32 %v248, %v334
    %v336 = vpop.f32.mrf.mxu0
    %337 = vdwg.mxu0
    %338 = vmatprep.subr.mxu0 0.0
    %339 = vmatpush1.msra.mxu0 0.0
    %340 = vmatprep.subr.mxu0 0.0
    %341 = vmatpush1.msra.mxu0 0.0
    %342 = vmatprep.subr.mxu0 0.0
    %343 = vmatpush1.msra.mxu0 0.0
    %344 = vmatprep.subr.mxu0 0.0
    %345 = vmatpush1.msra.mxu0 0.0
    %346 = vmatprep.subr.mxu0 0.0
    %347 = vmatpush1.msra.mxu0 0.0
    %348 = vmatprep.subr.mxu0 0.0
    %349 = vmatpush1.msra.mxu0 0.0
    %350 = vmatprep.subr.mxu0 0.0
    %351 = vmatpush1.msra.mxu0 0.0
    %352 = vmatprep.subr.mxu0 0.0
    %353 = vmatpush1.msra.mxu0 0.0
    %354 = vmatprep.subr.mxu0 0.0
    %355 = vmatpush1.msra.mxu0 0.0
    %356 = vmatprep.subr.mxu0 0.0
    %357 = vmatpush1.msra.mxu0 0.0
    %358 = vmatprep.subr.mxu0 0.0
    %359 = vmatpush1.msra.mxu0 0.0
    %360 = vmatprep.subr.mxu0 0.0
    %361 = vmatpush1.msra.mxu0 0.0
    %362 = vmatprep.subr.mxu0 0.0
    %v363 = vand.u32 %v57, 4294901760
    %364 = vmatpush1.msra.mxu0 %v363
    %365 = vmatprep.subr.mxu0 0.0
    %v366 = vand.u32 %v56, 4294901760
    %367 = vmatpush1.msra.mxu0 %v366
    %368 = vmatprep.subr.mxu0 0.0
    %v369 = vand.u32 %v55, 4294901760
    %370 = vmatpush1.msra.mxu0 %v369
    %371 = vmatprep.subr.mxu0 0.0
    %v372 = vand.u32 %v54, 4294901760
    %373 = vmatpush1.msra.mxu0 %v372
    %374 = vmatprep.subr.mxu0 0.0
    %375 = vmatpush2.msra.mxu0 0.0
    %376 = vmatprep.subr.mxu0 0.0
    %377 = vmatpush2.msra.mxu0 0.0
    %378 = vmatprep.subr.mxu0 0.0
    %379 = vmatpush2.msra.mxu0 0.0
    %380 = vmatprep.subr.mxu0 0.0
    %381 = vmatpush2.msra.mxu0 0.0
    %382 = vmatprep.subr.mxu0 0.0
    %383 = vmatpush2.msra.mxu0 0.0
    %384 = vmatprep.subr.mxu0 0.0
    %385 = vmatpush2.msra.mxu0 0.0
    %386 = vmatprep.subr.mxu0 0.0
    %387 = vmatpush2.msra.mxu0 0.0
    %388 = vmatprep.subr.mxu0 0.0
    %389 = vmatpush2.msra.mxu0 0.0
    %390 = vmatprep.subr.mxu0 0.0
    %391 = vmatpush2.msra.mxu0 0.0
    %392 = vmatprep.subr.mxu0 0.0
    %393 = vmatpush2.msra.mxu0 0.0
    %394 = vmatprep.subr.mxu0 0.0
    %395 = vmatpush2.msra.mxu0 0.0
    %396 = vmatprep.subr.mxu0 0.0
    %397 = vmatpush2.msra.mxu0 0.0
    %398 = vmatprep.subr.mxu0 0.0
    %399 = vmatpush2.msra.mxu0 0.0
    %400 = vmatprep.subr.mxu0 0.0
    %401 = vmatpush2.msra.mxu0 0.0
    %402 = vmatprep.subr.mxu0 0.0
    %403 = vmatpush2.msra.mxu0 0.0
    %404 = vmatprep.subr.mxu0 0.0
    %405 = vmatpush2.msra.mxu0 0.0
    %406 = vmatprep.mubr.f32.mxu0 0.0
    %v407 = vand.u32 %v60, 4294901760
    %v408 = vsub.f32 %v60, %v407
    %v409 = vand.u32 %v408, 4294901760
    %410 = vmatmul.mubr.f32.gmra.mxu0 %v409
    %v411 = vpop.f32.mrf.mxu0
    %v412 = vadd.f32 %v328, %v411
    %v413 = vpop.f32.mrf.mxu0
    %414 = vmatprep.mubr.f32.mxu0 0.0
    %v415 = vand.u32 %v63, 4294901760
    %v416 = vsub.f32 %v63, %v415
    %v417 = vand.u32 %v416, 4294901760
    %418 = vmatmul.mubr.f32.gmra.mxu0 %v417
    %v419 = vpop.f32.mrf.mxu0
    %v420 = vadd.f32 %v335, %v419
    %v421 = vpop.f32.mrf.mxu0
    %422 = vdwg.mxu0
    %423 = vmatprep.subr.mxu0 0.0
    %424 = vmatpush1.msra.mxu0 0.0
    %425 = vmatprep.subr.mxu0 0.0
    %426 = vmatpush1.msra.mxu0 0.0
    %427 = vmatprep.subr.mxu0 0.0
    %428 = vmatpush1.msra.mxu0 0.0
    %429 = vmatprep.subr.mxu0 0.0
    %430 = vmatpush1.msra.mxu0 0.0
    %431 = vmatprep.subr.mxu0 0.0
    %432 = vmatpush1.msra.mxu0 0.0
    %433 = vmatprep.subr.mxu0 0.0
    %434 = vmatpush1.msra.mxu0 0.0
    %435 = vmatprep.subr.mxu0 0.0
    %436 = vmatpush1.msra.mxu0 0.0
    %437 = vmatprep.subr.mxu0 0.0
    %438 = vmatpush1.msra.mxu0 0.0
    %439 = vmatprep.subr.mxu0 0.0
    %440 = vmatpush1.msra.mxu0 0.0
    %441 = vmatprep.subr.mxu0 0.0
    %442 = vmatpush1.msra.mxu0 0.0
    %443 = vmatprep.subr.mxu0 0.0
    %444 = vmatpush1.msra.mxu0 0.0
    %445 = vmatprep.subr.mxu0 0.0
    %446 = vmatpush1.msra.mxu0 0.0
    %447 = vmatprep.subr.mxu0 0.0
    %v448 = vand.u32 %v57, 4294901760
    %v449 = vsub.f32 %v57, %v448
    %v450 = vand.u32 %v449, 4294901760
    %451 = vmatpush1.msra.mxu0 %v450
    %452 = vmatprep.subr.mxu0 0.0
    %v453 = vand.u32 %v56, 4294901760
    %v454 = vsub.f32 %v56, %v453
    %v455 = vand.u32 %v454, 4294901760
    %456 = vmatpush1.msra.mxu0 %v455
    %457 = vmatprep.subr.mxu0 0.0
    %v458 = vand.u32 %v55, 4294901760
    %v459 = vsub.f32 %v55, %v458
    %v460 = vand.u32 %v459, 4294901760
    %461 = vmatpush1.msra.mxu0 %v460
    %462 = vmatprep.subr.mxu0 0.0
    %v463 = vand.u32 %v54, 4294901760
    %v464 = vsub.f32 %v54, %v463
    %v465 = vand.u32 %v464, 4294901760
    %466 = vmatpush1.msra.mxu0 %v465
    %467 = vmatprep.subr.mxu0 0.0
    %468 = vmatpush2.msra.mxu0 0.0
    %469 = vmatprep.subr.mxu0 0.0
    %470 = vmatpush2.msra.mxu0 0.0
    %471 = vmatprep.subr.mxu0 0.0
    %472 = vmatpush2.msra.mxu0 0.0
    %473 = vmatprep.subr.mxu0 0.0
    %474 = vmatpush2.msra.mxu0 0.0
    %475 = vmatprep.subr.mxu0 0.0
    %476 = vmatpush2.msra.mxu0 0.0
    %477 = vmatprep.subr.mxu0 0.0
    %478 = vmatpush2.msra.mxu0 0.0
    %479 = vmatprep.subr.mxu0 0.0
    %480 = vmatpush2.msra.mxu0 0.0
    %481 = vmatprep.subr.mxu0 0.0
    %482 = vmatpush2.msra.mxu0 0.0
    %483 = vmatprep.subr.mxu0 0.0
    %484 = vmatpush2.msra.mxu0 0.0
    %485 = vmatprep.subr.mxu0 0.0
    %486 = vmatpush2.msra.mxu0 0.0
    %487 = vmatprep.subr.mxu0 0.0
    %488 = vmatpush2.msra.mxu0 0.0
    %489 = vmatprep.subr.mxu0 0.0
    %490 = vmatpush2.msra.mxu0 0.0
    %491 = vmatprep.subr.mxu0 0.0
    %492 = vmatpush2.msra.mxu0 0.0
    %493 = vmatprep.subr.mxu0 0.0
    %494 = vmatpush2.msra.mxu0 0.0
    %495 = vmatprep.subr.mxu0 0.0
    %496 = vmatpush2.msra.mxu0 0.0
    %497 = vmatprep.subr.mxu0 0.0
    %498 = vmatpush2.msra.mxu0 0.0
    %499 = vmatprep.mubr.f32.mxu0 0.0
    %v500 = vand.u32 %v60, 4294901760
    %501 = vmatmul.mubr.f32.gmra.mxu0 %v500
    %v502 = vpop.f32.mrf.mxu0
    %v503 = vadd.f32 %v412, %v502
    %v504 = vpop.f32.mrf.mxu0
    %505 = vmatprep.mubr.f32.mxu0 0.0
    %v506 = vand.u32 %v63, 4294901760
    %507 = vmatmul.mubr.f32.gmra.mxu0 %v506
    %v508 = vpop.f32.mrf.mxu0
    %v509 = vadd.f32 %v420, %v508
    %v510 = vpop.f32.mrf.mxu0
    %511 = vdwg.mxu0
    %512 = vmatprep.subr.mxu0 0.0
    %513 = vmatpush1.msra.mxu0 0.0
    %514 = vmatprep.subr.mxu0 0.0
    %515 = vmatpush1.msra.mxu0 0.0
    %516 = vmatprep.subr.mxu0 0.0
    %517 = vmatpush1.msra.mxu0 0.0
    %518 = vmatprep.subr.mxu0 0.0
    %519 = vmatpush1.msra.mxu0 0.0
    %520 = vmatprep.subr.mxu0 0.0
    %521 = vmatpush1.msra.mxu0 0.0
    %522 = vmatprep.subr.mxu0 0.0
    %523 = vmatpush1.msra.mxu0 0.0
    %524 = vmatprep.subr.mxu0 0.0
    %525 = vmatpush1.msra.mxu0 0.0
    %526 = vmatprep.subr.mxu0 0.0
    %527 = vmatpush1.msra.mxu0 0.0
    %528 = vmatprep.subr.mxu0 0.0
    %529 = vmatpush1.msra.mxu0 0.0
    %530 = vmatprep.subr.mxu0 0.0
    %531 = vmatpush1.msra.mxu0 0.0
    %532 = vmatprep.subr.mxu0 0.0
    %533 = vmatpush1.msra.mxu0 0.0
    %534 = vmatprep.subr.mxu0 0.0
    %535 = vmatpush1.msra.mxu0 0.0
    %536 = vmatprep.subr.mxu0 0.0
    %v537 = vand.u32 %v57, 4294901760
    %538 = vmatpush1.msra.mxu0 %v537
    %539 = vmatprep.subr.mxu0 0.0
    %v540 = vand.u32 %v56, 4294901760
    %541 = vmatpush1.msra.mxu0 %v540
    %542 = vmatprep.subr.mxu0 0.0
    %v543 = vand.u32 %v55, 4294901760
    %544 = vmatpush1.msra.mxu0 %v543
    %545 = vmatprep.subr.mxu0 0.0
    %v546 = vand.u32 %v54, 4294901760
    %547 = vmatpush1.msra.mxu0 %v546
    %548 = vmatprep.subr.mxu0 0.0
    %549 = vmatpush2.msra.mxu0 0.0
    %550 = vmatprep.subr.mxu0 0.0
    %551 = vmatpush2.msra.mxu0 0.0
    %552 = vmatprep.subr.mxu0 0.0
    %553 = vmatpush2.msra.mxu0 0.0
    %554 = vmatprep.subr.mxu0 0.0
    %555 = vmatpush2.msra.mxu0 0.0
    %556 = vmatprep.subr.mxu0 0.0
    %557 = vmatpush2.msra.mxu0 0.0
    %558 = vmatprep.subr.mxu0 0.0
    %559 = vmatpush2.msra.mxu0 0.0
    %560 = vmatprep.subr.mxu0 0.0
    %561 = vmatpush2.msra.mxu0 0.0
    %562 = vmatprep.subr.mxu0 0.0
    %563 = vmatpush2.msra.mxu0 0.0
    %564 = vmatprep.subr.mxu0 0.0
    %565 = vmatpush2.msra.mxu0 0.0
    %566 = vmatprep.subr.mxu0 0.0
    %567 = vmatpush2.msra.mxu0 0.0
    %568 = vmatprep.subr.mxu0 0.0
    %569 = vmatpush2.msra.mxu0 0.0
    %570 = vmatprep.subr.mxu0 0.0
    %571 = vmatpush2.msra.mxu0 0.0
    %572 = vmatprep.subr.mxu0 0.0
    %573 = vmatpush2.msra.mxu0 0.0
    %574 = vmatprep.subr.mxu0 0.0
    %575 = vmatpush2.msra.mxu0 0.0
    %576 = vmatprep.subr.mxu0 0.0
    %577 = vmatpush2.msra.mxu0 0.0
    %578 = vmatprep.subr.mxu0 0.0
    %579 = vmatpush2.msra.mxu0 0.0
    %580 = vmatprep.mubr.f32.mxu0 0.0
    %v581 = vand.u32 %v60, 4294901760
    %582 = vmatmul.mubr.f32.gmra.mxu0 %v581
    %v583 = vpop.f32.mrf.mxu0
    %v584 = vadd.f32 %v503, %v583
    %v585 = vpop.f32.mrf.mxu0
    %586 = vmatprep.mubr.f32.mxu0 0.0
    %v587 = vand.u32 %v63, 4294901760
    %588 = vmatmul.mubr.f32.gmra.mxu0 %v587
    %v589 = vpop.f32.mrf.mxu0
    %v590 = vadd.f32 %v509, %v589
    %v591 = vpop.f32.mrf.mxu0
    %592 = vdwg.mxu0
    %v593 = vadd.f32 %v50, %v584
    %v594 = vadd.f32 %v51, %v590
    %vm595 = vcmask 785408
    %596 = vst.msk [vmem:[#allocation2] sm:$0xff] %vm595, %v593
    %597 = vst.msk [vmem:[#allocation2 + $0x8] sm:$0xff] %vm595, %v594
    // Predicated region
    $region26: #{tpu_custom_call.1} parent=1 // pred_check
      %p598 = pneg %p43
    $region27: #{tpu_custom_call.1} parent=1 // pred_check_branch
      %600 = sbr.rel (%p598) target = $region29
    $region28: #{tpu_custom_call.1} parent=1 // pred_region
      %v601 = vld [vmem:[#allocation2] sm:$0xff]
      %v602 = vld [vmem:[#allocation2 + $0x8] sm:$0xff]
      %v603 = vld [vmem:[%s2] sm:$0x1]
      %v605 = vlaneseq
      %v606 = vshrl.u32 %v605, 7
      %v607 = vsub.s32 0, %v606
      %v608 = vrot.slane %v603, %v607
      %v610 = vadd.f32 %v601, %v608
      %v611 = vadd.f32 %v602, %v608
      %612 = vst.msk [vmem:[#allocation8] sm:$0xff] %vm595, %v610
      %613 = vst.msk [vmem:[#allocation8 + $0x8] sm:$0xff] %vm595, %v611
    $region29: #{tpu_custom_call.1} parent=1 // pred_fallthru
      _
    // Predicated region
    $region30: #{tpu_custom_call.1} parent=1 // pred_check
      _
    $region31: #{tpu_custom_call.1} parent=1 // pred_check_branch
      %615 = sbr.rel (0) target = $region33
    $region32: #{tpu_custom_call.1} parent=1 // pred_region
      %s617 = ssub.s32 256, 256
      %618 = vsyncadd [#allocation5], %s617
      %s619 = sshll.u32 [#allocation8], 4
      %s620 = int_to_ptr.vmem [resolvable:$true] %s619
      %625 = dma.vmem_to_hbm [thread:$0]  %s620, 256, %s3, [#allocation5], 128, 128, 8
    $region33: #{tpu_custom_call.1} parent=1 // pred_fallthru
      _
    // Predicated region
    $region34: #{tpu_custom_call.1} parent=1 // pred_check
      _
    $region35: #{tpu_custom_call.1} parent=1 // pred_check_branch
      %627 = sbr.rel (0) target = $region37
    $region36: #{tpu_custom_call.1} parent=1 // pred_region
      %628 = dma.done [#allocation5], 256
    $region37: #{tpu_custom_call.1} parent=1 // pred_fallthru
      _
    %629 = vsyncpa [#allocation4], 1
    %630 = vsyncpa [#allocation7], 1
    %631 = vsyncpa [#allocation5], 1

</llo_original>
